<compile_context>
chip_gen: v7x
topology: tpu7x:2x2x1
jax: 0.10.0
libtpu: 0.0.40
codegen_flags: <defaults>
</compile_context>

<pallas_src>
import functools

import jax
import jax.numpy as jnp
from jax.experimental import pallas as pl
from jax.experimental.pallas import tpu as pltpu

_EPS = 1e-5
_PIPELINE_BUDGET_BYTES = 12 * 1024 * 1024     # dbl-buffered in/out blocks + temps
_SPATIAL_STATS_BLOCK_BYTES = 3 * 1024 * 1024  # (2, ctile, hw_tile) stats input block
_VMEM_LIMIT_BYTES = 32 * 1024 * 1024          # > v5e 16MiB default, << v7x 64MiB phys
_MIN_GRID_STEPS = 8                           # pipeline + 2 TCs on v7x


def _ceil_div(a, b):
    return -(-a // b)


def _round_up(a, b):
    return _ceil_div(a, b) * b


# --------------------------------------------------------------------------
# Path A: full spatial extent per block, everything fused in one kernel.
# --------------------------------------------------------------------------
def _fused_adain_kernel(x_ref, out_ref, *, inv_n):
    """x_ref: (2, tile, HW_pad) stacked content/style. out_ref: (tile, HW_pad)."""
    c = x_ref[0].astype(jnp.float32)
    s = x_ref[1].astype(jnp.float32)

    # One-pass stats: sum and sum-of-squares; padded lanes are zero and the
    # divisor is the true HW, so padding does not bias the statistics.
    s_mean = jnp.sum(s, axis=-1, keepdims=True) * inv_n
    s_var = jnp.maximum(
        jnp.sum(s * s, axis=-1, keepdims=True) * inv_n - s_mean * s_mean, 0.0)
    c_mean = jnp.sum(c, axis=-1, keepdims=True) * inv_n
    c_var = jnp.maximum(
        jnp.sum(c * c, axis=-1, keepdims=True) * inv_n - c_mean * c_mean, 0.0)

    # Fold per-channel scalars: out = c * scale + bias (2 VPU ops / element).
    scale = jax.lax.rsqrt(c_var + _EPS) * jnp.sqrt(s_var)
    bias = s_mean - c_mean * scale
    out_ref[...] = (c * scale + bias).astype(out_ref.dtype)


def _pick_channel_tile_full_hw(C_pad, HW_pad, itemsize):
    """Largest channel tile (multiple of the sublane base, dividing C_pad) that
    fits the pipeline budget and leaves >= _MIN_GRID_STEPS grid steps when C
    permits.  Returns None if even the minimum tile exceeds the budget
    (-> spatial-split path)."""
    base = max(8, 32 // itemsize)            # 8 for f32, 16 for bf16, 32 for 8-bit
    # Per channel per step: (content+style) + out, double-buffered, + f32 temps.
    per_channel = HW_pad * (3 * 2 * itemsize + 2 * 4)
    cap_mem = _PIPELINE_BUDGET_BYTES // per_channel
    if cap_mem < base:
        return None
    cap = min(cap_mem, max(base, C_pad // _MIN_GRID_STEPS))
    tile = base
    t = 2 * base
    while t <= cap:
        if C_pad % t == 0:
            tile = t
        t += base
    return tile


def _adain_fused_call(x_flat, tile, hw_true):
    _, C_pad, HW_pad = x_flat.shape
    grid = (C_pad // tile,)
    kernel = functools.partial(_fused_adain_kernel, inv_n=1.0 / float(hw_true))
    return pl.pallas_call(
        kernel,
        out_shape=jax.ShapeDtypeStruct((C_pad, HW_pad), x_flat.dtype),
        grid_spec=pltpu.PrefetchScalarGridSpec(
            num_scalar_prefetch=0,
            grid=grid,
            in_specs=[pl.BlockSpec((2, tile, HW_pad), lambda i: (0, i, 0))],
            out_specs=pl.BlockSpec((tile, HW_pad), lambda i: (i, 0)),
        ),
        compiler_params=pltpu.CompilerParams(
            dimension_semantics=("parallel",),
            vmem_limit_bytes=_VMEM_LIMIT_BYTES,
        ),
    )(x_flat)


# --------------------------------------------------------------------------
# Path B (large HW): spatial-split stats kernel + lane-dense apply kernel.
# --------------------------------------------------------------------------
def _stats_kernel(x_ref, sum_c_ref, ssq_c_ref, sum_s_ref, ssq_s_ref):
    """x_ref: (2, ctile, hw_tile). Accumulates per-channel sums across the
    (last, "arbitrary") HW grid axis into resident (ctile, 1) f32 outputs."""
    @pl.when(pl.program_id(1) == 0)
    def _init():
        sum_c_ref[...] = jnp.zeros_like(sum_c_ref)
        ssq_c_ref[...] = jnp.zeros_like(ssq_c_ref)
        sum_s_ref[...] = jnp.zeros_like(sum_s_ref)
        ssq_s_ref[...] = jnp.zeros_like(ssq_s_ref)

    c = x_ref[0].astype(jnp.float32)
    s = x_ref[1].astype(jnp.float32)
    sum_c_ref[...] += jnp.sum(c, axis=-1, keepdims=True)
    ssq_c_ref[...] += jnp.sum(c * c, axis=-1, keepdims=True)
    sum_s_ref[...] += jnp.sum(s, axis=-1, keepdims=True)
    ssq_s_ref[...] += jnp.sum(s * s, axis=-1, keepdims=True)


def _apply_kernel(x_ref, scale_ref, bias_ref, out_ref):
    """x_ref: (ctile, hw_tile) content block; scale/bias: (ctile, 1) f32."""
    c = x_ref[...].astype(jnp.float32)
    out_ref[...] = (c * scale_ref[...] + bias_ref[...]).astype(out_ref.dtype)


def _pick_spatial_tiles(HW, itemsize, hw_block_target=None):
    base = max(8, 32 // itemsize)
    ctile = base
    if hw_block_target is None:
        hw_target = (_SPATIAL_STATS_BLOCK_BYTES // (2 * ctile * itemsize)) // 128 * 128
        hw_target = max(128, hw_target)
    else:
        hw_target = max(128, (hw_block_target // 128) * 128)
    n_hw = _ceil_div(HW, hw_target)
    hw_tile = _round_up(_ceil_div(HW, n_hw), 128)
    HW_pad = n_hw * hw_tile
    return ctile, hw_tile, n_hw, HW_pad


def _adain_split_call(x_flat, ctile, hw_tile, hw_true):
    _, C_pad, HW_pad = x_flat.shape
    n_c = C_pad // ctile
    n_hw = HW_pad // hw_tile

    stat_shape = jax.ShapeDtypeStruct((C_pad, 1), jnp.float32)
    stat_specs = [pl.BlockSpec((ctile, 1), lambda i, j: (i, 0)) for _ in range(4)]
    sum_c, ssq_c, sum_s, ssq_s = pl.pallas_call(
        _stats_kernel,
        out_shape=(stat_shape, stat_shape, stat_shape, stat_shape),
        grid_spec=pltpu.PrefetchScalarGridSpec(
            num_scalar_prefetch=0,
            grid=(n_c, n_hw),
            in_specs=[pl.BlockSpec((2, ctile, hw_tile), lambda i, j: (0, i, j))],
            out_specs=tuple(stat_specs),
        ),
        compiler_params=pltpu.CompilerParams(
            dimension_semantics=("parallel", "arbitrary"),
            vmem_limit_bytes=_VMEM_LIMIT_BYTES,
        ),
    )(x_flat)

    # Tiny per-channel (C,1) math; done in plain XLA outside the kernels.
    inv_n = 1.0 / float(hw_true)
    mean_c = sum_c * inv_n
    var_c = jnp.maximum(ssq_c * inv_n - mean_c * mean_c, 0.0)
    mean_s = sum_s * inv_n
    var_s = jnp.maximum(ssq_s * inv_n - mean_s * mean_s, 0.0)
    scale = jax.lax.rsqrt(var_c + _EPS) * jnp.sqrt(var_s)
    bias = mean_s - mean_c * scale

    return pl.pallas_call(
        _apply_kernel,
        out_shape=jax.ShapeDtypeStruct((C_pad, HW_pad), x_flat.dtype),
        grid_spec=pltpu.PrefetchScalarGridSpec(
            num_scalar_prefetch=0,
            grid=(n_c, n_hw),
            in_specs=[
                pl.BlockSpec((pl.Squeezed(), ctile, hw_tile), lambda i, j: (0, i, j)),
                pl.BlockSpec((ctile, 1), lambda i, j: (i, 0)),
                pl.BlockSpec((ctile, 1), lambda i, j: (i, 0)),
            ],
            out_specs=pl.BlockSpec((ctile, hw_tile), lambda i, j: (i, j)),
        ),
        compiler_params=pltpu.CompilerParams(
            dimension_semantics=("parallel", "parallel"),
            vmem_limit_bytes=_VMEM_LIMIT_BYTES,
        ),
    )(x_flat, scale, bias)


# --------------------------------------------------------------------------
# Wrapper
# --------------------------------------------------------------------------
def _pad_2d(x_flat, C_pad, HW_pad):
    _, C, HW = x_flat.shape
    if C_pad == C and HW_pad == HW:
        return x_flat
    return jnp.pad(x_flat, ((0, 0), (0, C_pad - C), (0, HW_pad - HW)))


@functools.partial(jax.jit, static_argnames=("force_spatial_split", "hw_block_target"))
def adaptive_instance_norm(x, *, force_spatial_split=False, hw_block_target=None):
    """x: (2, C, H, W) -> (1, C, H, W), matching the PyTorch module's forward."""
    assert x.ndim == 4 and x.shape[0] == 2, "expected stacked (content, style)"
    _, C, H, W = x.shape
    HW = H * W
    itemsize = jnp.dtype(x.dtype).itemsize
    base = max(8, 32 // itemsize)
    C_pad = _round_up(C, base)

    x_flat = x.reshape(2, C, HW)   # metadata-only reshape (contiguous)

    tile = None
    if not force_spatial_split:
        tile = _pick_channel_tile_full_hw(C_pad, _round_up(HW, 128), itemsize)

    if tile is not None:
        # Path A: full spatial extent per block (1-4 MiB blocks, >=8 steps).
        HW_pad = _round_up(HW, 128)                     # lane-dense stores
        x_flat = _pad_2d(x_flat, C_pad, HW_pad)
        out_full = _adain_fused_call(x_flat, tile, HW)
    else:
        # Path B: HW too large for any full-extent channel block -> spatial
        # split with partial-sum accumulation + separate apply pass.
        ctile, hw_tile, _, HW_pad = _pick_spatial_tiles(HW, itemsize, hw_block_target)
        x_flat = _pad_2d(x_flat, C_pad, HW_pad)
        out_full = _adain_split_call(x_flat, ctile, hw_tile, HW)

    return out_full[:C, :HW].reshape(1, C, H, W)


def _reference(x):
    """Pure-JAX reference mirroring the PyTorch module."""
    content, style = x[0], x[1]
    C = content.shape[0]
    c = content.reshape(C, -1).astype(jnp.float32)
    s = style.reshape(C, -1).astype(jnp.float32)
    c_mean = c.mean(-1, keepdims=True)
    c_var = ((c - c_mean) ** 2).mean(-1, keepdims=True)
    s_mean = s.mean(-1, keepdims=True)
    s_std = jnp.sqrt(((s - s_mean) ** 2).mean(-1, keepdims=True))
    out = (c - c_mean) / jnp.sqrt(c_var + _EPS) * s_std + s_mean
    return out.reshape(1, *content.shape).astype(x.dtype)


if __name__ == "__main__":
    # NOTE: the PyTorch module hardcodes nOutput=512; here C plays that role at
    # a small deterministic test size (HW a multiple of 128 -> lane-dense).
    key = jax.random.PRNGKey(0)
    C, H, W = 16, 16, 16
    x = jax.random.normal(key, (2, C, H, W), dtype=jnp.float32)

    ref = _reference(x)

    # Path A (fused, full spatial extent per block).
    out_fused = jax.block_until_ready(adaptive_instance_norm(x))
    assert out_fused.shape == (1, C, H, W), out_fused.shape
    assert jnp.allclose(out_fused, ref, atol=1e-4, rtol=1e-4), (
        float(jnp.max(jnp.abs(out_fused - ref))))

    # Path B (spatial split: stats accumulation + apply), forced at small shape
    # to exercise the large-HW code path with 2 HW blocks.
    out_split = jax.block_until_ready(
        adaptive_instance_norm(x, force_spatial_split=True, hw_block_target=128))
    assert out_split.shape == (1, C, H, W), out_split.shape
    assert jnp.allclose(out_split, ref, atol=1e-4, rtol=1e-4), (
        float(jnp.max(jnp.abs(out_split - ref))))

    print("KERNEL_OK")
</pallas_src>

<mosaic_0001>
module attributes {stable_mosaic.version = 11 : i64} {
  func.func @_fused_adain_kernel(%arg0: i32, %arg1: memref<2x8x256xf32, #tpu.memory_space<vmem>>, %arg2: memref<8x256xf32, #tpu.memory_space<vmem>>) attributes {dimension_semantics = [#tpu.dimension_semantics<parallel>], iteration_bounds = array<i64: 2>, scalar_prefetch = 0 : i64, scratch_operands = 0 : i64, tpu.core_type = #tpu.core_type<tc>, window_params = [{transform_indices = @transform_0, window_bounds = array<i64: 2, 8, 256>}, {transform_indices = @transform_1, window_bounds = array<i64: 8, 256>}]} {
    %c0 = arith.constant 0 : index
    %c0_0 = arith.constant 0 : index
    %c0_1 = arith.constant 0 : index
    %0 = vector.load %arg1[%c0, %c0_0, %c0_1] : memref<2x8x256xf32, #tpu.memory_space<vmem>>, vector<1x8x256xf32>
    %1 = vector.shape_cast %0 : vector<1x8x256xf32> to vector<8x256xf32>
    %c1 = arith.constant 1 : index
    %c0_2 = arith.constant 0 : index
    %c0_3 = arith.constant 0 : index
    %2 = vector.load %arg1[%c1, %c0_2, %c0_3] : memref<2x8x256xf32, #tpu.memory_space<vmem>>, vector<1x8x256xf32>
    %3 = vector.shape_cast %2 : vector<1x8x256xf32> to vector<8x256xf32>
    %cst = arith.constant dense<0.000000e+00> : vector<8xf32>
    %4 = vector.multi_reduction <add>, %3, %cst [1] : vector<8x256xf32> to vector<8xf32>
    %5 = vector.shape_cast %4 : vector<8xf32> to vector<8x1xf32>
    %cst_4 = arith.constant 3.906250e-03 : f32
    %6 = vector.broadcast %cst_4 : f32 to vector<8x1xf32>
    %7 = arith.mulf %5, %6 : vector<8x1xf32>
    %8 = arith.mulf %3, %3 : vector<8x256xf32>
    %cst_5 = arith.constant dense<0.000000e+00> : vector<8xf32>
    %9 = vector.multi_reduction <add>, %8, %cst_5 [1] : vector<8x256xf32> to vector<8xf32>
    %10 = vector.shape_cast %9 : vector<8xf32> to vector<8x1xf32>
    %cst_6 = arith.constant 3.906250e-03 : f32
    %11 = vector.broadcast %cst_6 : f32 to vector<8x1xf32>
    %12 = arith.mulf %10, %11 : vector<8x1xf32>
    %13 = arith.mulf %7, %7 : vector<8x1xf32>
    %14 = arith.subf %12, %13 : vector<8x1xf32>
    %cst_7 = arith.constant 0.000000e+00 : f32
    %15 = vector.broadcast %cst_7 : f32 to vector<8x1xf32>
    %16 = arith.maximumf %14, %15 : vector<8x1xf32>
    %cst_8 = arith.constant dense<0.000000e+00> : vector<8xf32>
    %17 = vector.multi_reduction <add>, %1, %cst_8 [1] : vector<8x256xf32> to vector<8xf32>
    %18 = vector.shape_cast %17 : vector<8xf32> to vector<8x1xf32>
    %cst_9 = arith.constant 3.906250e-03 : f32
    %19 = vector.broadcast %cst_9 : f32 to vector<8x1xf32>
    %20 = arith.mulf %18, %19 : vector<8x1xf32>
    %21 = arith.mulf %1, %1 : vector<8x256xf32>
    %cst_10 = arith.constant dense<0.000000e+00> : vector<8xf32>
    %22 = vector.multi_reduction <add>, %21, %cst_10 [1] : vector<8x256xf32> to vector<8xf32>
    %23 = vector.shape_cast %22 : vector<8xf32> to vector<8x1xf32>
    %cst_11 = arith.constant 3.906250e-03 : f32
    %24 = vector.broadcast %cst_11 : f32 to vector<8x1xf32>
    %25 = arith.mulf %23, %24 : vector<8x1xf32>
    %26 = arith.mulf %20, %20 : vector<8x1xf32>
    %27 = arith.subf %25, %26 : vector<8x1xf32>
    %cst_12 = arith.constant 0.000000e+00 : f32
    %28 = vector.broadcast %cst_12 : f32 to vector<8x1xf32>
    %29 = arith.maximumf %27, %28 : vector<8x1xf32>
    %cst_13 = arith.constant 9.99999974E-6 : f32
    %30 = vector.broadcast %cst_13 : f32 to vector<8x1xf32>
    %31 = arith.addf %29, %30 : vector<8x1xf32>
    %32 = math.rsqrt %31 : vector<8x1xf32>
    %33 = math.sqrt %16 : vector<8x1xf32>
    %34 = arith.mulf %32, %33 : vector<8x1xf32>
    %35 = arith.mulf %20, %34 : vector<8x1xf32>
    %36 = arith.subf %7, %35 : vector<8x1xf32>
    %37 = vector.broadcast %34 : vector<8x1xf32> to vector<8x256xf32>
    %38 = arith.mulf %1, %37 : vector<8x256xf32>
    %39 = vector.broadcast %36 : vector<8x1xf32> to vector<8x256xf32>
    %40 = arith.addf %38, %39 : vector<8x256xf32>
    %c0_14 = arith.constant 0 : index
    %c0_15 = arith.constant 0 : index
    %41 = vector.load %arg2[%c0_14, %c0_15] : memref<8x256xf32, #tpu.memory_space<vmem>>, vector<8x256xf32>
    tpu.vector_store %arg2[%c0_14, %c0_15], %40 {strides = array<i32>} : memref<8x256xf32, #tpu.memory_space<vmem>>, vector<8x256xf32>,
    return
  }
  func.func @transform_0(%arg0: i32) -> (i32, i32, i32) {
    %c0_i32 = arith.constant 0 : i32
    %c0_i32_0 = arith.constant 0 : i32
    %c0_i32_1 = arith.constant 0 : i32
    return %c0_i32, %arg0, %c0_i32_0 : i32, i32, i32
  }
  func.func @transform_1(%arg0: i32) -> (i32, i32) {
    %c0_i32 = arith.constant 0 : i32
    %c0_i32_0 = arith.constant 0 : i32
    return %arg0, %c0_i32 : i32, i32
  }
}

</mosaic_0001>

<llo_original>
// kernel: adaptive_instance_norm.1
$region0: #{adaptive_instance_norm.1}
  #allocation0 [shape = 'u32[]', space=smem, size = 0x4, offset = 0x4, fixed_abs, tag = 'smem constant byte address 0x4 - core index']
  #allocation1 [shape = 'u32[144,128]{1,0:T(1,128)}', space=vmem, size = 0x12000, scoped, tag = 'internal scratch']
  %s0 = inlined_call_operand.vmem [shape: f32[2,16,256], index: 0, kind: input, shape index: {}]
  %s1 = inlined_call_operand.vmem [shape: f32[16,256], index: 1, kind: output, shape index: {}]
  %s2 = sld [smem:[#allocation0]]
  $region60: #{adaptive_instance_norm.1} parent=0
    _
  %s4 = ssub.s32 1, %s2
  %s5 = scalar_select 0, %s4, %s2
  $region1: #{adaptive_instance_norm.1} parent=0
    #allocation2 [shape = 'u8[32768]{0}', space=vmem, size = 0x8000, scoped, tag = 'input window, operand 0']
    loop: start=0, step=1, limit=4
    $region2: #{adaptive_instance_norm.1} parent=1 // loop_pre_header
      _
    $region3: #{adaptive_instance_norm.1} parent=1 // loop_header
      %s7 = sphi 0, %s11
      %p8 = scmp.ge.s32.totalorder %s7, 4
      %s17 = sphi 0, %s19
      %s20 = sphi 0, %s17
      %s21 = sphi 0, %s20
      %s37 = sphi 0, %s21
      %s43 = sphi 0, %s45
      %s46 = sphi 0, %s43
      %s47 = sphi 0, %s46
      %s63 = sphi 0, %s47
    $region4: #{adaptive_instance_norm.1} parent=1 // loop_header_branch
      %10 = sbr.rel (%p8) target = $region8
    $region5: #{adaptive_instance_norm.1} parent=1 // loop_body
      %s12 = ssub.s32 %s7, 1
      %s13 = ssub.s32 %s7, 2
      %s14 = sadd.s32 %s7, 1
      %s15 = ssub.s32 %s7, %s14
      %p16 = scmp.eq.s32.totalorder %s15, 0
      %s18 = sadd.s32 %s17, 1
      %s19 = scalar_select %p16, %s17, %s18
      %p22 = pneg %p16
      %p23 = scmp.eq.s32.totalorder %s7, 1
      %p24 = por %p22, %p23
      %p25 = scmp.ne.s32.totalorder %s17, %s20
      %p26 = scmp.eq.s32.totalorder %s7, 0
      %p27 = por %p25, %p26
      %p28 = scmp.ne.s32.totalorder %s17, %s20
      %p29 = scmp.eq.s32.totalorder %s12, 1
      %p30 = por %p28, %p29
      %p31 = scmp.ne.s32.totalorder %s20, %s21
      %p32 = scmp.eq.s32.totalorder %s12, 0
      %p33 = por %p31, %p32
      %p34 = scmp.ne.s32.totalorder %s20, %s21
      %p35 = scmp.eq.s32.totalorder %s13, 1
      %p36 = por %p34, %p35
      %p38 = scmp.ne.s32.totalorder %s21, %s37
      %p39 = scmp.eq.s32.totalorder %s13, 0
      %p40 = por %p38, %p39
      %s41 = ssub.s32 %s7, %s14
      %p42 = scmp.eq.s32.totalorder %s41, 0
      %s44 = sadd.s32 %s43, 1
      %s45 = scalar_select %p42, %s43, %s44
      %p48 = pneg %p42
      %p49 = scmp.eq.s32.totalorder %s7, 1
      %p50 = por %p48, %p49
      %p51 = scmp.ne.s32.totalorder %s43, %s46
      %p52 = scmp.eq.s32.totalorder %s7, 0
      %p53 = por %p51, %p52
      %p54 = scmp.ne.s32.totalorder %s43, %s46
      %p55 = scmp.eq.s32.totalorder %s12, 1
      %p56 = por %p54, %p55
      %p57 = scmp.ne.s32.totalorder %s46, %s47
      %p58 = scmp.eq.s32.totalorder %s12, 0
      %p59 = por %p57, %p58
      %p60 = scmp.ne.s32.totalorder %s46, %s47
      %p61 = scmp.eq.s32.totalorder %s13, 1
      %p62 = por %p60, %p61
      %p64 = scmp.ne.s32.totalorder %s47, %s63
      %p65 = scmp.eq.s32.totalorder %s13, 0
      %p66 = por %p64, %p65
      %p67 = scmp.le.s32.totalorder 1, %s7
      %p68 = scmp.lt.s32.totalorder %s7, 3
      %p69 = pnand %p67, %p68
      %p70 = pneg %p69
      // Predicated region
      $region9: #{adaptive_instance_norm.1} parent=5 // pred_check
        _
      $region10: #{adaptive_instance_norm.1} parent=5 // pred_check_branch
        %72 = sbr.rel (%p69) target = $region12
      $region11: #{adaptive_instance_norm.1} parent=5 // pred_region
        %s73 = ssub.s32 %s7, 1
      $region12: #{adaptive_instance_norm.1} parent=5 // pred_fallthru
        _
      %p74 = scmp.lt.s32.totalorder %s7, 2
      // Predicated region
      $region13: #{adaptive_instance_norm.1} parent=5 // pred_check
        %p75 = pneg %p74
      $region14: #{adaptive_instance_norm.1} parent=5 // pred_check_branch
        %77 = sbr.rel (%p75) target = $region16
      $region15: #{adaptive_instance_norm.1} parent=5 // pred_region
        // Predicated region
        $region17: #{adaptive_instance_norm.1} parent=15 // pred_check
          %p78 = pneg %p27
        $region18: #{adaptive_instance_norm.1} parent=15 // pred_check_branch
          %80 = sbr.rel (%p78) target = $region20
        $region19: #{adaptive_instance_norm.1} parent=15 // pred_region
          %s81 = sand.u32 %s17, 1
          %s82 = sand.u32 %s17, 1
          %s83 = smul.addr %s82, 32
          %s84 = scalar_lea.vmem [#allocation2], %s83
          %s85 = smul.addr %s7, 2
          %s86 = smul.addr %s85, 8
          %s87 = scalar_lea.vmem %s0, %s86
          // Predicated region
          $region21: #{adaptive_instance_norm.1} parent=19 // pred_check
            _
          $region22: #{adaptive_instance_norm.1} parent=19 // pred_check_branch
            %89 = sbr.rel (0) target = $region24
          $region23: #{adaptive_instance_norm.1} parent=19 // pred_region
            // Predicated region
            $region25: #{adaptive_instance_norm.1} parent=23 // pred_check
              _
            $region26: #{adaptive_instance_norm.1} parent=23 // pred_check_branch
              %91 = sbr.rel (0) target = $region28
            $region27: #{adaptive_instance_norm.1} parent=23 // pred_region
              loop: start=0, step=1, limit=1
              $region29: #{adaptive_instance_norm.1} parent=27 // loop_pre_header
                _
              $region30: #{adaptive_instance_norm.1} parent=27 // loop_header
                %s93 = sphi 0, %s97
                %p94 = scmp.ge.s32.totalorder %s93, 1
                %s98 = sphi %s87, %s87
                %s99 = sphi %s84, %s84
              $region31: #{adaptive_instance_norm.1} parent=27 // loop_header_branch
                %96 = sbr.rel (%p94) target = $region35
              $region32: #{adaptive_instance_norm.1} parent=27 // loop_body
                %v100 = vld [vmem:[%s98] sm:$0xff]
                %101 = vst [vmem:[%s99] sm:$0xff] %v100
                %v102 = vld [vmem:[%s98 + $0x8] sm:$0xff]
                %103 = vst [vmem:[%s99 + $0x8] sm:$0xff] %v102
                %v104 = vld [vmem:[%s98 + $0x20] sm:$0xff]
                %105 = vst [vmem:[%s99 + $0x10] sm:$0xff] %v104
                %v106 = vld [vmem:[%s98 + $0x28] sm:$0xff]
                %107 = vst [vmem:[%s99 + $0x18] sm:$0xff] %v106
              $region33: #{adaptive_instance_norm.1} parent=27 // loop_footer
                %s97 = sadd.s32 1, %s93
              $region34: #{adaptive_instance_norm.1} parent=27 // loop_footer_branch
                %92 = sbr.rel target = $region30
              $region35: #{adaptive_instance_norm.1} parent=27 // loop_exit
                _
            $region28: #{adaptive_instance_norm.1} parent=23 // pred_fallthru
              _
            // Predicated region
            $region36: #{adaptive_instance_norm.1} parent=23 // pred_check
              _
            $region37: #{adaptive_instance_norm.1} parent=23 // pred_check_branch
              %109 = sbr.rel target = $region39
            $region38: #{adaptive_instance_norm.1} parent=23 // pred_region
              _
            $region39: #{adaptive_instance_norm.1} parent=23 // pred_fallthru
              _
          $region24: #{adaptive_instance_norm.1} parent=19 // pred_fallthru
            _
          %110 = vnop
        $region20: #{adaptive_instance_norm.1} parent=15 // pred_fallthru
          _
      $region16: #{adaptive_instance_norm.1} parent=5 // pred_fallthru
        _
      %p111 = scmp.le.s32.totalorder 1, %s7
      %p112 = scmp.lt.s32.totalorder %s7, 3
      %p113 = pnand %p111, %p112
      %p114 = pneg %p113
      // Predicated region
      $region40: #{adaptive_instance_norm.1} parent=5 // pred_check
        _
      $region41: #{adaptive_instance_norm.1} parent=5 // pred_check_branch
        %116 = sbr.rel (%p113) target = $region43
      $region42: #{adaptive_instance_norm.1} parent=5 // pred_region
        %s117 = ssub.s32 %s7, 1
        %s118 = sand.u32 %s20, 1
        %s119 = sand.u32 %s20, 1
        %s120 = smul.addr %s119, 32
        %s121 = scalar_lea.vmem [#allocation2], %s120
        // Predicated region
        $region44: #{adaptive_instance_norm.1} parent=42 // pred_check
          %p122 = pneg %p33
        $region45: #{adaptive_instance_norm.1} parent=42 // pred_check_branch
          %124 = sbr.rel (%p122) target = $region47
        $region46: #{adaptive_instance_norm.1} parent=42 // pred_region
          _
        $region47: #{adaptive_instance_norm.1} parent=42 // pred_fallthru
          _
        %s125 = sand.u32 %s20, 1
        %s126 = sand.u32 %s20, 1
        %s127 = smul.addr %s126, 32
        %s128 = scalar_lea.vmem [#allocation2], %s127
        %p129 = pneg %p33
        %p130 = pneg %p30
        %p131 = pneg %p59
        %p132 = pneg %p56
        %p133 = scmp.lt.s32.totalorder %s12, 1
        %s134 = scalar_select %p133, %s12, 1
        %s135 = smul.addr %s134, 2
        %s136 = smul.addr %s135, 8
        %s137 = scalar_lea.vmem %s1, %s136
        %p138 = scmp.lt.s32.totalorder %s12, 1
        %s139 = scalar_select %p138, %s12, 1
        %s140 = smul.addr %s139, 2
        %s141 = smul.addr %s140, 8
        %s142 = scalar_lea.vmem %s1, %s141
        %v143 = vld [vmem:[%s121] sm:$0xff]
        %v144 = vld [vmem:[%s121 + $0x8] sm:$0xff]
        %s145 = scalar_lea.vmem %s121, 16 [#allocation2]
        %v146 = vld [vmem:[%s145] sm:$0xff]
        %v147 = vld [vmem:[%s145 + $0x8] sm:$0xff]
        %v148 = vadd.f32 %v146, %v147
        %149 = vadd.xlane.f32.xlu0 %v148
        %v150 = vpop.xlane.xlu0 %149
        %v151 = vmul.f32 %v150, 0.00390625
        %v152 = vmul.f32 %v146, %v146
        %v153 = vmul.f32 %v147, %v147
        %v154 = vadd.f32 %v152, %v153
        %155 = vadd.xlane.f32.xlu0 %v154
        %v156 = vpop.xlane.xlu0 %155
        %v157 = vmul.f32 %v156, 0.00390625
        %v158 = vmul.f32 %v151, %v151
        %v159 = vsub.f32 %v157, %v158
        %v160 = vmax.f32 %v159, 0.0
        %v161 = vadd.f32 %v143, %v144
        %162 = vadd.xlane.f32.xlu0 %v161
        %v163 = vpop.xlane.xlu0 %162
        %v164 = vmul.f32 %v163, 0.00390625
        %v165 = vmul.f32 %v143, %v143
        %v166 = vmul.f32 %v144, %v144
        %v167 = vadd.f32 %v165, %v166
        %168 = vadd.xlane.f32.xlu0 %v167
        %v169 = vpop.xlane.xlu0 %168
        %v170 = vmul.f32 %v169, 0.00390625
        %v171 = vmul.f32 %v164, %v164
        %v172 = vsub.f32 %v170, %v171
        %v173 = vmax.f32 %v172, 0.0
        %v174 = vadd.f32 %v173, 1e-05
        %v175 = vrsqrt.pop %v174
        %v176 = vrsqrt.pop %v160
        %v177 = vmul.f32 %v160, %v176
        %vm178 = vcmp.eq.f32.partialorder %v160, inf
        %v179 = vsel %vm178, %v160, %v177
        %vm180 = vcmp.eq.f32.partialorder %v160, 0.0
        %v181 = vand.u32 %v160, 2147483648
        %v182 = vsel %vm180, %v181, %v179
        %v183 = vmul.f32 %v175, %v182
        %v184 = vmul.f32 %v164, %v183
        %v185 = vsub.f32 %v151, %v184
        %v186 = vmul.f32 %v143, %v183
        %v187 = vmul.f32 %v144, %v183
        %v188 = vadd.f32 %v186, %v185
        %v189 = vadd.f32 %v187, %v185
        %190 = vst [vmem:[%s142] sm:$0xff] %v188
        %191 = vst [vmem:[%s142 + $0x8] sm:$0xff] %v189
        %p192 = scmp.lt.s32.totalorder %s12, 1
        %s193 = scalar_select %p192, %s12, 1
        %s194 = smul.addr %s193, 2
        %s195 = smul.addr %s194, 8
        %s196 = scalar_lea.vmem %s1, %s195
        // Predicated region
        $region48: #{adaptive_instance_norm.1} parent=42 // pred_check
          %p197 = pneg %p56
        $region49: #{adaptive_instance_norm.1} parent=42 // pred_check_branch
          %199 = sbr.rel (%p197) target = $region51
        $region50: #{adaptive_instance_norm.1} parent=42 // pred_region
          _
        $region51: #{adaptive_instance_norm.1} parent=42 // pred_fallthru
          _
      $region43: #{adaptive_instance_norm.1} parent=5 // pred_fallthru
        _
      %p200 = scmp.le.s32.totalorder 2, %s7
      // Predicated region
      $region52: #{adaptive_instance_norm.1} parent=5 // pred_check
        %p201 = pneg %p200
      $region53: #{adaptive_instance_norm.1} parent=5 // pred_check_branch
        %203 = sbr.rel (%p201) target = $region55
      $region54: #{adaptive_instance_norm.1} parent=5 // pred_region
        %s204 = ssub.s32 %s7, 2
        // Predicated region
        $region56: #{adaptive_instance_norm.1} parent=54 // pred_check
          %p205 = pneg %p62
        $region57: #{adaptive_instance_norm.1} parent=54 // pred_check_branch
          %207 = sbr.rel (%p205) target = $region59
        $region58: #{adaptive_instance_norm.1} parent=54 // pred_region
          %p208 = scmp.lt.s32.totalorder %s13, 1
          %s209 = scalar_select %p208, %s13, 1
          %s210 = smul.addr %s209, 2
          %s211 = smul.addr %s210, 8
          %s212 = scalar_lea.vmem %s1, %s211
        $region59: #{adaptive_instance_norm.1} parent=54 // pred_fallthru
          _
      $region55: #{adaptive_instance_norm.1} parent=5 // pred_fallthru
        _
    $region6: #{adaptive_instance_norm.1} parent=1 // loop_footer
      %s11 = sadd.s32 1, %s7
    $region7: #{adaptive_instance_norm.1} parent=1 // loop_footer_branch
      %6 = sbr.rel target = $region3
    $region8: #{adaptive_instance_norm.1} parent=1 // loop_exit
      _

</llo_original>
